<compile_context>
chip_gen: v7x
topology: tpu7x:2x2x1
jax: 0.10.0
libtpu: 0.0.40
codegen_flags: <defaults>
</compile_context>

<pallas_src>
import math
from functools import reduce

import jax
import jax.numpy as jnp
import numpy as np
from jax.experimental import pallas as pl
from jax.experimental.pallas import tpu as pltpu

# ---- configuration mirroring quant_arc_interface.args -----------------------
N_QUBITS = 4          # args.n_qubits
Q_DEPTH = 3           # args.q_depth
SECOND_QUBITS = 4     # qai.second_qubits
Q_DELTA = 0.01        # args.q_delta
DIM = 2 ** N_QUBITS
TB_MAX = 8192         # max batch lanes per grid step (multiple of 128)

# ---- numpy glue: batch-independent circuit constants -------------------------
_I2 = np.eye(2, dtype=np.float32)
_X = np.array([[0.0, 1.0], [1.0, 0.0]], dtype=np.float32)
_P0 = np.array([[1.0, 0.0], [0.0, 0.0]], dtype=np.float32)
_P1 = np.array([[0.0, 0.0], [0.0, 1.0]], dtype=np.float32)


def _cnot_full(control, target, n):
    ops0 = [_I2] * n
    ops0[control] = _P0
    ops1 = [_I2] * n
    ops1[control] = _P1
    ops1[target] = _X
    return reduce(np.kron, ops0) + reduce(np.kron, ops1)


def _entangling_layer(n):
    u = np.eye(2 ** n, dtype=np.float32)
    for i in range(0, n - 1, 2):
        u = _cnot_full(i, i + 1, n) @ u
    for i in range(1, n - 1, 2):
        u = _cnot_full(i, i + 1, n) @ u
    return u


_ENT = _entangling_layer(N_QUBITS)


def _ry(theta):
    c = jnp.cos(theta / 2.0)
    s = jnp.sin(theta / 2.0)
    return jnp.stack([jnp.stack([c, -s]), jnp.stack([s, c])])


def _kron_all(mats):
    return reduce(jnp.kron, mats)


def build_param_unitary(q_params):
    """Parameter-dependent (batch-independent) part of the circuit -> (DIM, DIM)."""
    w = q_params.reshape(Q_DEPTH, N_QUBITS)
    u = jnp.eye(DIM, dtype=jnp.float32)
    ent = jnp.asarray(_ENT)
    for k in range(Q_DEPTH):
        u = ent @ u
        ry_layer = _kron_all([_ry(w[k, i]) for i in range(N_QUBITS)])
        u = ry_layer @ u
    return u


def _bit_tables():
    ks = np.arange(DIM)
    # qubit 0 is the most significant bit of the basis index (kron ordering above)
    bits_qk = np.stack(
        [(ks >> (N_QUBITS - 1 - i)) & 1 for i in range(N_QUBITS)]
    ).astype(np.float32)                                      # (N_QUBITS, DIM)
    bits = np.ascontiguousarray(bits_qk.T)                    # (DIM, N_QUBITS)
    zsign_t = (1.0 - 2.0 * bits_qk[:SECOND_QUBITS]).astype(np.float32)  # (SQ, DIM)
    return bits, zsign_t


# ---- Pallas kernel: batched circuit simulation, batch on the lane axis -------
def qnet1_kernel(x_ref, u_ref, o_ref):
    x = x_ref[...]                                   # (N_QUBITS, tb)  batch on lanes

    # torch: q_in = tanh(x) * pi/2 ; H then RY(q_in) on |0> gives amplitudes
    #   amp0 = (cos(q_in/2) - sin(q_in/2))/sqrt2 = cos(q_in/2 + pi/4)
    #   amp1 = (cos(q_in/2) + sin(q_in/2))/sqrt2 = sin(q_in/2 + pi/4)
    half = jnp.tanh(x) * np.float32(math.pi / 4.0) + np.float32(math.pi / 4.0)
    a0 = jnp.cos(half)                               # (N_QUBITS, tb)
    a1 = jnp.sin(half)                               # (N_QUBITS, tb)

    # Kron-doubling build of the product state, qubit 0 as MSB of the basis
    # index: 2 -> 4 -> 8 -> 16 rows (28 row-multiplies total, no bit table).
    psi = jnp.concatenate(
        [a0[N_QUBITS - 1:N_QUBITS, :], a1[N_QUBITS - 1:N_QUBITS, :]], axis=0)
    for i in range(N_QUBITS - 2, -1, -1):
        psi = jnp.concatenate([a0[i:i + 1, :] * psi,
                               a1[i:i + 1, :] * psi], axis=0)   # (2^(N-i), tb)

    # Parameterized circuit + measurement, both on the MXU (lane-wide tiles).
    psi_out = jnp.dot(u_ref[...], psi, preferred_element_type=jnp.float32)  # (DIM, tb)
    probs = psi_out * psi_out

    # Z-sign matrix built in-kernel from a tiny 2-D iota (static shifts); no
    # extra operand / DMA.  zs[q, k] = (-1)^{bit_q(k)}.
    k_idx = jax.lax.broadcasted_iota(jnp.int32, (1, DIM), 1)    # (1, DIM)
    zs_rows = []
    for q in range(SECOND_QUBITS):
        bit = jnp.bitwise_and(
            jax.lax.shift_right_logical(k_idx, N_QUBITS - 1 - q), 1)
        zs_rows.append(1.0 - 2.0 * bit.astype(jnp.float32))
    zs = jnp.concatenate(zs_rows, axis=0)                        # (SQ, DIM)

    o_ref[...] = jnp.dot(zs, probs, preferred_element_type=jnp.float32)  # (SQ, tb)


def _choose_tile(b):
    """Batch tile (lanes) and padded batch.  Multiple of 128, capped so the
    grid has >= 2 steps when possible (v7x megacore), and <= TB_MAX."""
    bp128 = 128 * pl.cdiv(max(b, 1), 128)
    tb = 128 * pl.cdiv(pl.cdiv(bp128, 2), 128)
    tb = max(128, min(TB_MAX, tb))
    bp = tb * pl.cdiv(bp128, tb)
    return tb, bp


def qnet1_forward_t(xT, q_params):
    """Feature-major entry point: xT is (N_QUBITS, B), returns (SECOND_QUBITS, B).
    Use this from adjacent layers to avoid extra transpose HBM passes."""
    b = xT.shape[1]
    u = build_param_unitary(q_params).astype(jnp.float32)

    tb, bp = _choose_tile(b)
    xT = xT.astype(jnp.float32)
    if bp != b:
        xT = jnp.pad(xT, ((0, 0), (0, bp - b)))      # padded lanes produce valid,
    grid = (bp // tb,)                               # discarded states

    out_t = pl.pallas_call(
        qnet1_kernel,
        out_shape=jax.ShapeDtypeStruct((SECOND_QUBITS, bp), jnp.float32),
        grid_spec=pltpu.PrefetchScalarGridSpec(
            num_scalar_prefetch=0,
            grid=grid,
            in_specs=[
                pl.BlockSpec((N_QUBITS, tb), lambda i: (0, i)),
                # constant: same block index every step -> stays VMEM-resident
                pl.BlockSpec((DIM, DIM), lambda i: (0, 0)),
            ],
            out_specs=pl.BlockSpec((SECOND_QUBITS, tb), lambda i: (0, i)),
        ),
        compiler_params=pltpu.CompilerParams(
            dimension_semantics=("parallel",),
            # explicit scoped-VMEM budget: safe on v5e's 16 MiB default and well
            # under v7x's 64 MiB physical; actual use at tb=8192 is ~5 MiB.
            vmem_limit_bytes=32 * 1024 * 1024),
    )(xT, u)

    return out_t[:, :b]                              # (SECOND_QUBITS, B)


def qnet1_forward(input_features, q_params):
    """Batch-major adapter matching the torch module: (B, N_QUBITS) -> (B, SQ)."""
    xT = jnp.transpose(input_features.astype(jnp.float32))      # (N_QUBITS, B)
    return jnp.transpose(qnet1_forward_t(xT, q_params))          # (B, SQ)


# ---- pure-JAX reference (same math, no Pallas) -------------------------------
def qnet1_reference(x, q_params):
    x = x.astype(jnp.float32)
    q_in = jnp.tanh(x) * (math.pi / 2.0)
    u = build_param_unitary(q_params)
    bits_np, zsignT_np = _bit_tables()
    half = 0.5 * q_in
    a0 = (jnp.cos(half) - jnp.sin(half)) / math.sqrt(2.0)
    a1 = (jnp.cos(half) + jnp.sin(half)) / math.sqrt(2.0)
    psi = jnp.ones((x.shape[0], DIM), jnp.float32)
    for i in range(N_QUBITS):
        bi = bits_np[:, i][None, :]                              # (1, DIM)
        psi = psi * (a0[:, i:i + 1] * (1.0 - bi) + a1[:, i:i + 1] * bi)
    psi = psi @ u.T
    return (psi * psi) @ jnp.asarray(zsignT_np).T


if __name__ == "__main__":
    key = jax.random.PRNGKey(0)
    kx, kp, kx2 = jax.random.split(key, 3)
    # q_params = q_delta * randn(q_depth * n_qubits), deterministic in-script
    q_params = Q_DELTA * jax.random.normal(kp, (Q_DEPTH * N_QUBITS,), dtype=jnp.float32)

    # Small batch: padded to a single 128-lane tile, one grid step.
    x_small = jax.random.normal(kx, (8, N_QUBITS), dtype=jnp.float32)
    out_small = jax.block_until_ready(qnet1_forward(x_small, q_params))
    ref_small = qnet1_reference(x_small, q_params)
    np.testing.assert_allclose(np.asarray(out_small), np.asarray(ref_small),
                               rtol=1e-4, atol=1e-5)

    # Larger batch: tile chosen so the grid has 2 parallel steps (640 -> 2x384).
    x_big = jax.random.normal(kx2, (640, N_QUBITS), dtype=jnp.float32)
    out_big = jax.block_until_ready(qnet1_forward(x_big, q_params))
    ref_big = qnet1_reference(x_big, q_params)
    np.testing.assert_allclose(np.asarray(out_big), np.asarray(ref_big),
                               rtol=1e-4, atol=1e-5)

    print("KERNEL_OK")
</pallas_src>

<mosaic_0001>
module attributes {stable_mosaic.version = 11 : i64} {
  func.func @qnet1_kernel(%arg0: i32, %arg1: memref<4x128xf32, #tpu.memory_space<vmem>>, %arg2: memref<16x16xf32, #tpu.memory_space<vmem>>, %arg3: memref<4x128xf32, #tpu.memory_space<vmem>>) attributes {dimension_semantics = [#tpu.dimension_semantics<parallel>], iteration_bounds = array<i64: 1>, scalar_prefetch = 0 : i64, scratch_operands = 0 : i64, tpu.core_type = #tpu.core_type<tc>, window_params = [{transform_indices = @transform_0, window_bounds = array<i64: 4, 128>}, {pipeline_mode = #tpu.pipeline_mode<synchronous>, transform_indices = @transform_1, window_bounds = array<i64: 16, 16>}, {transform_indices = @transform_2, window_bounds = array<i64: 4, 128>}]} {
    %c0 = arith.constant 0 : index
    %c0_0 = arith.constant 0 : index
    %0 = vector.load %arg1[%c0, %c0_0] : memref<4x128xf32, #tpu.memory_space<vmem>>, vector<4x128xf32>
    %1 = math.tanh %0 : vector<4x128xf32>
    %cst = arith.constant 0.785398185 : f32
    %2 = vector.broadcast %cst : f32 to vector<4x128xf32>
    %3 = arith.mulf %1, %2 : vector<4x128xf32>
    %cst_1 = arith.constant 0.785398185 : f32
    %4 = vector.broadcast %cst_1 : f32 to vector<4x128xf32>
    %5 = arith.addf %3, %4 : vector<4x128xf32>
    %6 = math.cos %5 : vector<4x128xf32>
    %7 = math.sin %5 : vector<4x128xf32>
    %8 = vector.extract_strided_slice %6 {offsets = [3, 0], sizes = [1, 128], strides = [1, 1]} : vector<4x128xf32> to vector<1x128xf32>
    %9 = vector.extract_strided_slice %7 {offsets = [3, 0], sizes = [1, 128], strides = [1, 1]} : vector<4x128xf32> to vector<1x128xf32>
    %10 = tpu.concatenate %8, %9 in 0 : vector<1x128xf32>, vector<1x128xf32> -> vector<2x128xf32>
    %11 = vector.extract_strided_slice %6 {offsets = [2, 0], sizes = [1, 128], strides = [1, 1]} : vector<4x128xf32> to vector<1x128xf32>
    %12 = vector.broadcast %11 : vector<1x128xf32> to vector<2x128xf32>
    %13 = arith.mulf %12, %10 : vector<2x128xf32>
    %14 = vector.extract_strided_slice %7 {offsets = [2, 0], sizes = [1, 128], strides = [1, 1]} : vector<4x128xf32> to vector<1x128xf32>
    %15 = vector.broadcast %14 : vector<1x128xf32> to vector<2x128xf32>
    %16 = arith.mulf %15, %10 : vector<2x128xf32>
    %17 = tpu.concatenate %13, %16 in 0 : vector<2x128xf32>, vector<2x128xf32> -> vector<4x128xf32>
    %18 = vector.extract_strided_slice %6 {offsets = [1, 0], sizes = [1, 128], strides = [1, 1]} : vector<4x128xf32> to vector<1x128xf32>
    %19 = vector.broadcast %18 : vector<1x128xf32> to vector<4x128xf32>
    %20 = arith.mulf %19, %17 : vector<4x128xf32>
    %21 = vector.extract_strided_slice %7 {offsets = [1, 0], sizes = [1, 128], strides = [1, 1]} : vector<4x128xf32> to vector<1x128xf32>
    %22 = vector.broadcast %21 : vector<1x128xf32> to vector<4x128xf32>
    %23 = arith.mulf %22, %17 : vector<4x128xf32>
    %24 = tpu.concatenate %20, %23 in 0 : vector<4x128xf32>, vector<4x128xf32> -> vector<8x128xf32>
    %25 = vector.extract_strided_slice %6 {offsets = [0, 0], sizes = [1, 128], strides = [1, 1]} : vector<4x128xf32> to vector<1x128xf32>
    %26 = vector.broadcast %25 : vector<1x128xf32> to vector<8x128xf32>
    %27 = arith.mulf %26, %24 : vector<8x128xf32>
    %28 = vector.extract_strided_slice %7 {offsets = [0, 0], sizes = [1, 128], strides = [1, 1]} : vector<4x128xf32> to vector<1x128xf32>
    %29 = vector.broadcast %28 : vector<1x128xf32> to vector<8x128xf32>
    %30 = arith.mulf %29, %24 : vector<8x128xf32>
    %31 = tpu.concatenate %27, %30 in 0 : vector<8x128xf32>, vector<8x128xf32> -> vector<16x128xf32>
    %c0_2 = arith.constant 0 : index
    %c0_3 = arith.constant 0 : index
    %32 = vector.load %arg2[%c0_2, %c0_3] : memref<16x16xf32, #tpu.memory_space<vmem>>, vector<16x16xf32>
    %cst_4 = arith.constant dense<0.000000e+00> : vector<16x128xf32>
    %33 = tpu.matmul %32, %31, %cst_4 {dimension_numbers = #tpu.dot_dimension_numbers<[1], [0], [0], [1], [0, 0, 1, 1], [], []>} : vector<16x16xf32>, vector<16x128xf32>, vector<16x128xf32> -> vector<16x128xf32>
    %34 = arith.mulf %33, %33 : vector<16x128xf32>
    %35 = tpu.iota {dimensions = array<i32: 1>} : vector<1x16xi32>
    %c3_i32 = arith.constant 3 : i32
    %36 = vector.broadcast %c3_i32 : i32 to vector<1x16xi32>
    %37 = arith.shrui %35, %36 : vector<1x16xi32>
    %c1_i32 = arith.constant 1 : i32
    %38 = vector.broadcast %c1_i32 : i32 to vector<1x16xi32>
    %39 = arith.andi %37, %38 : vector<1x16xi32>
    %40 = arith.sitofp %39 : vector<1x16xi32> to vector<1x16xf32>
    %cst_5 = arith.constant 2.000000e+00 : f32
    %41 = vector.broadcast %cst_5 : f32 to vector<1x16xf32>
    %42 = arith.mulf %41, %40 : vector<1x16xf32>
    %cst_6 = arith.constant 1.000000e+00 : f32
    %43 = vector.broadcast %cst_6 : f32 to vector<1x16xf32>
    %44 = arith.subf %43, %42 : vector<1x16xf32>
    %c2_i32 = arith.constant 2 : i32
    %45 = vector.broadcast %c2_i32 : i32 to vector<1x16xi32>
    %46 = arith.shrui %35, %45 : vector<1x16xi32>
    %c1_i32_7 = arith.constant 1 : i32
    %47 = vector.broadcast %c1_i32_7 : i32 to vector<1x16xi32>
    %48 = arith.andi %46, %47 : vector<1x16xi32>
    %49 = arith.sitofp %48 : vector<1x16xi32> to vector<1x16xf32>
    %cst_8 = arith.constant 2.000000e+00 : f32
    %50 = vector.broadcast %cst_8 : f32 to vector<1x16xf32>
    %51 = arith.mulf %50, %49 : vector<1x16xf32>
    %cst_9 = arith.constant 1.000000e+00 : f32
    %52 = vector.broadcast %cst_9 : f32 to vector<1x16xf32>
    %53 = arith.subf %52, %51 : vector<1x16xf32>
    %c1_i32_10 = arith.constant 1 : i32
    %54 = vector.broadcast %c1_i32_10 : i32 to vector<1x16xi32>
    %55 = arith.shrui %35, %54 : vector<1x16xi32>
    %c1_i32_11 = arith.constant 1 : i32
    %56 = vector.broadcast %c1_i32_11 : i32 to vector<1x16xi32>
    %57 = arith.andi %55, %56 : vector<1x16xi32>
    %58 = arith.sitofp %57 : vector<1x16xi32> to vector<1x16xf32>
    %cst_12 = arith.constant 2.000000e+00 : f32
    %59 = vector.broadcast %cst_12 : f32 to vector<1x16xf32>
    %60 = arith.mulf %59, %58 : vector<1x16xf32>
    %cst_13 = arith.constant 1.000000e+00 : f32
    %61 = vector.broadcast %cst_13 : f32 to vector<1x16xf32>
    %62 = arith.subf %61, %60 : vector<1x16xf32>
    %c0_i32 = arith.constant 0 : i32
    %63 = vector.broadcast %c0_i32 : i32 to vector<1x16xi32>
    %64 = arith.shrui %35, %63 : vector<1x16xi32>
    %c1_i32_14 = arith.constant 1 : i32
    %65 = vector.broadcast %c1_i32_14 : i32 to vector<1x16xi32>
    %66 = arith.andi %64, %65 : vector<1x16xi32>
    %67 = arith.sitofp %66 : vector<1x16xi32> to vector<1x16xf32>
    %cst_15 = arith.constant 2.000000e+00 : f32
    %68 = vector.broadcast %cst_15 : f32 to vector<1x16xf32>
    %69 = arith.mulf %68, %67 : vector<1x16xf32>
    %cst_16 = arith.constant 1.000000e+00 : f32
    %70 = vector.broadcast %cst_16 : f32 to vector<1x16xf32>
    %71 = arith.subf %70, %69 : vector<1x16xf32>
    %72 = tpu.concatenate %44, %53, %62, %71 in 0 : vector<1x16xf32>, vector<1x16xf32>, vector<1x16xf32>, vector<1x16xf32> -> vector<4x16xf32>
    %cst_17 = arith.constant dense<0.000000e+00> : vector<4x128xf32>
    %73 = tpu.matmul %72, %34, %cst_17 {dimension_numbers = #tpu.dot_dimension_numbers<[1], [0], [0], [1], [0, 0, 1, 1], [], []>} : vector<4x16xf32>, vector<16x128xf32>, vector<4x128xf32> -> vector<4x128xf32>
    %c0_18 = arith.constant 0 : index
    %c0_19 = arith.constant 0 : index
    %74 = vector.load %arg3[%c0_18, %c0_19] : memref<4x128xf32, #tpu.memory_space<vmem>>, vector<4x128xf32>
    tpu.vector_store %arg3[%c0_18, %c0_19], %73 {strides = array<i32>} : memref<4x128xf32, #tpu.memory_space<vmem>>, vector<4x128xf32>,
    return
  }
  func.func @transform_0(%arg0: i32) -> (i32, i32) {
    %c0_i32 = arith.constant 0 : i32
    %c0_i32_0 = arith.constant 0 : i32
    return %c0_i32, %arg0 : i32, i32
  }
  func.func @transform_1(%arg0: i32) -> (i32, i32) {
    %c0_i32 = arith.constant 0 : i32
    %c0_i32_0 = arith.constant 0 : i32
    %c0_i32_1 = arith.constant 0 : i32
    return %c0_i32, %c0_i32_0 : i32, i32
  }
  func.func @transform_2(%arg0: i32) -> (i32, i32) {
    %c0_i32 = arith.constant 0 : i32
    %c0_i32_0 = arith.constant 0 : i32
    return %c0_i32, %arg0 : i32, i32
  }
}

</mosaic_0001>

<llo_original>
// kernel: tpu_custom_call.1
$region0: #{tpu_custom_call.1}
  #allocation0 [shape = 'u32[]', space=smem, size = 0x4, offset = 0x4, fixed_abs, tag = 'smem constant byte address 0x4 - core index']
  #allocation1 [shape = 'u32[144,128]{1,0:T(1,128)}', space=vmem, size = 0x12000, scoped, tag = 'internal scratch']
  %s0 = inlined_call_operand.hbm [shape: f32[4,128], index: 0, kind: input, shape index: {}]
  %s1 = inlined_call_operand.hbm [shape: f32[16,16], index: 1, kind: input, shape index: {}]
  %s2 = inlined_call_operand.hbm [shape: f32[4,128], index: 2, kind: output, shape index: {}]
  %s3 = sld [smem:[#allocation0]]
  $region26: #{tpu_custom_call.1} parent=0
    _
  %s5 = ssub.s32 1, %s3
  %s6 = scalar_select 0, %s5, %s3
  $region1: #{tpu_custom_call.1} parent=0
    #allocation2 [shape = 'u8[2048]{0}', space=vmem, size = 0x800, scoped, tag = 'input window, operand 0, single buffered']
    #allocation3 [shape = 's32[1]{0}', space=sflag, size = 0x4, scoped, tag = 'scoped memory for tpu_custom_call.1']
    #allocation4 [shape = 's32[1]{0}', space=sflag, size = 0x4, scoped, tag = 'scoped memory for tpu_custom_call.1']
    #allocation5 [shape = 'u8[8192]{0}', space=vmem, size = 0x2000, scoped, tag = 'input window, operand 1, single buffered']
    #allocation6 [shape = 's32[1]{0}', space=sflag, size = 0x4, scoped, tag = 'scoped memory for tpu_custom_call.1']
    #allocation7 [shape = 'u8[2048]{0}', space=vmem, size = 0x800, scoped, tag = 'output window, operand 0, single buffered']
    %7 = vsyncpa [#allocation3], 0
    %8 = vsyncpa [#allocation6], 0
    %9 = vsyncpa [#allocation4], 0
    // Predicated region
    $region2: #{tpu_custom_call.1} parent=1 // pred_check
      _
    $region3: #{tpu_custom_call.1} parent=1 // pred_check_branch
      %11 = sbr.rel (0) target = $region5
    $region4: #{tpu_custom_call.1} parent=1 // pred_region
      %s13 = ssub.s32 64, 64
      %14 = vsyncadd [#allocation3], %s13
      %s16 = sshll.u32 [#allocation2], 4
      %s17 = int_to_ptr.vmem [resolvable:$true] %s16
      %19 = dma.hbm_to_vmem [thread:$0]  %s0, 64, %s17, [#allocation3]
    $region5: #{tpu_custom_call.1} parent=1 // pred_fallthru
      _
    // Predicated region
    $region6: #{tpu_custom_call.1} parent=1 // pred_check
      _
    $region7: #{tpu_custom_call.1} parent=1 // pred_check_branch
      %21 = sbr.rel (0) target = $region9
    $region8: #{tpu_custom_call.1} parent=1 // pred_region
      %s23 = ssub.s32 256, 256
      %24 = vsyncadd [#allocation6], %s23
      %s25 = sshll.u32 [#allocation5], 4
      %s26 = int_to_ptr.vmem [resolvable:$true] %s25
      %31 = dma.hbm_to_vmem [thread:$0]  %s1, 256, %s26, [#allocation6], 128, 128, 8
    $region9: #{tpu_custom_call.1} parent=1 // pred_fallthru
      _
    // Predicated region
    $region10: #{tpu_custom_call.1} parent=1 // pred_check
      _
    $region11: #{tpu_custom_call.1} parent=1 // pred_check_branch
      %33 = sbr.rel (0) target = $region13
    $region12: #{tpu_custom_call.1} parent=1 // pred_region
      %34 = dma.done [#allocation3], 64
    $region13: #{tpu_custom_call.1} parent=1 // pred_fallthru
      _
    // Predicated region
    $region14: #{tpu_custom_call.1} parent=1 // pred_check
      _
    $region15: #{tpu_custom_call.1} parent=1 // pred_check_branch
      %36 = sbr.rel (0) target = $region17
    $region16: #{tpu_custom_call.1} parent=1 // pred_region
      %37 = dma.done [#allocation6], 256
    $region17: #{tpu_custom_call.1} parent=1 // pred_fallthru
      _
    %v38 = vld [vmem:[#allocation2] sm:$0xf]
    %v39 = vtanh.pop %v38
    %v40 = vmul.f32 %v39, 0.7853982
    %v41 = vadd.f32 %v40, 0.7853982
    %v42 = vand.u32 2147483647, %v41
    %vm43 = vcmp.le.f32.partialorder %v42, 0.7853982
    %vm44 = vcmp.lt.s32.totalorder %v41, 0
    %v45 = vand.u32 %v41, 2139095040
    %v46 = vshrl.u32 %v45, 23
    %v47 = vsub.s32 %v46, 127
    %v48 = vand.u32 2147483647, %v41
    %v49 = vand.u32 %v48, 8388607
    %v50 = vor.u32 %v49, 8388608
    %v51 = vsub.s32 0, %v50
    %v52 = vadd.s32 %v47, 1
    %vm53 = vcmp.gt.s32.totalorder %v52, 0
    %v54 = vsel %vm53, %v52, 0
    %v55 = vshrl.u32 %v54, 5
    %v56 = vand.u32 %v54, 31
    %v57 = vsub.s32 32, %v56
    %v58 = vshrl.u32 683565275, %v57
    %v59 = vshll.u32 683565275, %v56
    %v60 = vshrl.u32 2475754826, %v57
    %v61 = vor.u32 %v59, %v60
    %v62 = vshll.u32 2475754826, %v56
    %v63 = vshrl.u32 2131351028, %v57
    %v64 = vor.u32 %v62, %v63
    %v65 = vshll.u32 2131351028, %v56
    %v66 = vshrl.u32 2102212464, %v57
    %v67 = vor.u32 %v65, %v66
    %v68 = vshll.u32 2102212464, %v56
    %v69 = vshrl.u32 920167782, %v57
    %v70 = vor.u32 %v68, %v69
    %v71 = vshll.u32 920167782, %v56
    %v72 = vshrl.u32 1326507024, %v57
    %v73 = vor.u32 %v71, %v72
    %vm74 = vcmp.lt.s32.totalorder %v55, 1
    %vm75 = vcmp.lt.s32.totalorder %v55, 2
    %vm76 = vcmp.lt.s32.totalorder %v55, 3
    %vm77 = vcmp.lt.s32.totalorder %v55, 4
    %v78 = vsel %vm74, %v58, %v61
    %v79 = vsel %vm77, %v67, 2102212464
    %v80 = vsel %vm76, %v64, %v79
    %v81 = vsel %vm75, %v78, %v80
    %v82 = vsel %vm74, %v61, %v64
    %v83 = vsel %vm77, %v70, 920167782
    %v84 = vsel %vm76, %v67, %v83
    %v85 = vsel %vm75, %v82, %v84
    %v86 = vsel %vm74, %v64, %v67
    %v87 = vsel %vm77, %v73, 1326507024
    %v88 = vsel %vm76, %v70, %v87
    %v89 = vsel %vm75, %v86, %v88
    %v90 = vshll.u32 %v50, 8
    %v91 = vmul.u32.u64.compose %v90, %v89
    %v92 = vextract.low.u32 %v91
    %v93 = vextract.high.u32 %v91
    %v94 = vmul.u32.u64.compose %v90, %v85
    %v95 = vextract.low.u32 %v94
    %v96 = vextract.high.u32 %v94
    %v97 = vmul.u32 %v90, %v81
    %v98 = vadd.s32 %v93, %v95
    %vm99 = vc.u32 %v93, %v95
    %v100 = vadd.s32 %v96, 1
    %v101 = vsel %vm99, %v100, %v96
    %v102 = vadd.s32 %v97, %v101
    %v103 = vadd.s32 %v102, 536870912
    %v104 = vshrl.u32 %v103, 30
    %v105 = vshll.u32 %v104, 30
    %v106 = vsub.s32 %v102, %v105
    %vm107 = vcmp.lt.s32.totalorder %v106, 0
    %v108 = vsub.s32 0, %v106
    %v109 = vsel %vm107, %v108, %v106
    %v110 = vclz %v109
    %v111 = vsub.s32 %v110, 2
    %vm112 = vcmp.gt.s32.totalorder 0, %v111
    %v113 = vsel %vm112, 0, %v111
    %v114 = vsub.s32 32, %v113
    %v115 = vshll.u32 %v106, %v113
    %v116 = vshrl.u32 %v98, %v114
    %v117 = vor.u32 %v115, %v116
    %v118 = vsub.s32 4294967266, %v113
    %v119 = vadd.s32 %v118, 127
    %v120 = vshll.u32 %v119, 23
    %v121 = vor.u32 4788187, %v120
    %v122 = vand.u32 2147483647, %v121
    %v124 = vcvt.s32.f32 %v117
    %v125 = vmul.f32 %v124, %v122
    %v126 = vxor.u32 %v125, 2147483648
    %v127 = vsel %vm44, %v126, %v125
    %v128 = vsub.s32 4, %v104
    %v129 = vsel %vm44, %v128, %v104
    %v130 = vsel %vm43, %v41, %v127
    %v131 = vsel %vm43, 0, %v129
    %v132 = vcosq.f32.pop %v130
    %v133 = vsinq.f32.pop %v130
    %vm134 = vweird.f32 %v41
    %v135 = vand.u32 %v131, 3
    %vm136 = vcmp.lt.s32.totalorder %v135, 2
    %vm137 = vcmp.eq.s32.totalorder %v135, 0
    %v138 = vxor.u32 %v133, 2147483648
    %v139 = vsel %vm137, %v132, %v138
    %vm140 = vcmp.eq.s32.totalorder %v135, 2
    %v141 = vxor.u32 %v132, 2147483648
    %v142 = vsel %vm140, %v141, %v133
    %v143 = vsel %vm136, %v139, %v142
    %v144 = vsel %vm134, nan, %v143
    %v145 = vand.u32 2147483647, %v41
    %vm146 = vcmp.le.f32.partialorder %v145, 0.7853982
    %vm147 = vcmp.lt.s32.totalorder %v41, 0
    %v148 = vand.u32 %v41, 2139095040
    %v149 = vshrl.u32 %v148, 23
    %v150 = vsub.s32 %v149, 127
    %v151 = vand.u32 2147483647, %v41
    %v152 = vand.u32 %v151, 8388607
    %v153 = vor.u32 %v152, 8388608
    %v154 = vsub.s32 0, %v153
    %v155 = vadd.s32 %v150, 1
    %vm156 = vcmp.gt.s32.totalorder %v155, 0
    %v157 = vsel %vm156, %v155, 0
    %v158 = vshrl.u32 %v157, 5
    %v159 = vand.u32 %v157, 31
    %v160 = vsub.s32 32, %v159
    %v161 = vshrl.u32 683565275, %v160
    %v162 = vshll.u32 683565275, %v159
    %v163 = vshrl.u32 2475754826, %v160
    %v164 = vor.u32 %v162, %v163
    %v165 = vshll.u32 2475754826, %v159
    %v166 = vshrl.u32 2131351028, %v160
    %v167 = vor.u32 %v165, %v166
    %v168 = vshll.u32 2131351028, %v159
    %v169 = vshrl.u32 2102212464, %v160
    %v170 = vor.u32 %v168, %v169
    %v171 = vshll.u32 2102212464, %v159
    %v172 = vshrl.u32 920167782, %v160
    %v173 = vor.u32 %v171, %v172
    %v174 = vshll.u32 920167782, %v159
    %v175 = vshrl.u32 1326507024, %v160
    %v176 = vor.u32 %v174, %v175
    %vm177 = vcmp.lt.s32.totalorder %v158, 1
    %vm178 = vcmp.lt.s32.totalorder %v158, 2
    %vm179 = vcmp.lt.s32.totalorder %v158, 3
    %vm180 = vcmp.lt.s32.totalorder %v158, 4
    %v181 = vsel %vm177, %v161, %v164
    %v182 = vsel %vm180, %v170, 2102212464
    %v183 = vsel %vm179, %v167, %v182
    %v184 = vsel %vm178, %v181, %v183
    %v185 = vsel %vm177, %v164, %v167
    %v186 = vsel %vm180, %v173, 920167782
    %v187 = vsel %vm179, %v170, %v186
    %v188 = vsel %vm178, %v185, %v187
    %v189 = vsel %vm177, %v167, %v170
    %v190 = vsel %vm180, %v176, 1326507024
    %v191 = vsel %vm179, %v173, %v190
    %v192 = vsel %vm178, %v189, %v191
    %v193 = vshll.u32 %v153, 8
    %v194 = vmul.u32.u64.compose %v193, %v192
    %v195 = vextract.low.u32 %v194
    %v196 = vextract.high.u32 %v194
    %v197 = vmul.u32.u64.compose %v193, %v188
    %v198 = vextract.low.u32 %v197
    %v199 = vextract.high.u32 %v197
    %v200 = vmul.u32 %v193, %v184
    %v201 = vadd.s32 %v196, %v198
    %vm202 = vc.u32 %v196, %v198
    %v203 = vadd.s32 %v199, 1
    %v204 = vsel %vm202, %v203, %v199
    %v205 = vadd.s32 %v200, %v204
    %v206 = vadd.s32 %v205, 536870912
    %v207 = vshrl.u32 %v206, 30
    %v208 = vshll.u32 %v207, 30
    %v209 = vsub.s32 %v205, %v208
    %vm210 = vcmp.lt.s32.totalorder %v209, 0
    %v211 = vsub.s32 0, %v209
    %v212 = vsel %vm210, %v211, %v209
    %v213 = vclz %v212
    %v214 = vsub.s32 %v213, 2
    %vm215 = vcmp.gt.s32.totalorder 0, %v214
    %v216 = vsel %vm215, 0, %v214
    %v217 = vsub.s32 32, %v216
    %v218 = vshll.u32 %v209, %v216
    %v219 = vshrl.u32 %v201, %v217
    %v220 = vor.u32 %v218, %v219
    %v221 = vsub.s32 4294967266, %v216
    %v222 = vadd.s32 %v221, 127
    %v223 = vshll.u32 %v222, 23
    %v224 = vor.u32 4788187, %v223
    %v225 = vand.u32 2147483647, %v224
    %v227 = vcvt.s32.f32 %v220
    %v228 = vmul.f32 %v227, %v225
    %v229 = vxor.u32 %v228, 2147483648
    %v230 = vsel %vm147, %v229, %v228
    %v231 = vsub.s32 4, %v207
    %v232 = vsel %vm147, %v231, %v207
    %v233 = vsel %vm146, %v41, %v230
    %v234 = vsel %vm146, 0, %v232
    %v235 = vcosq.f32.pop %v233
    %v236 = vsinq.f32.pop %v233
    %vm237 = vweird.f32 %v41
    %v238 = vadd.s32 %v234, 3
    %v239 = vand.u32 %v238, 3
    %vm240 = vcmp.lt.s32.totalorder %v239, 2
    %vm241 = vcmp.eq.s32.totalorder %v239, 0
    %v242 = vxor.u32 %v236, 2147483648
    %v243 = vsel %vm241, %v235, %v242
    %vm244 = vcmp.eq.s32.totalorder %v239, 2
    %v245 = vxor.u32 %v235, 2147483648
    %v246 = vsel %vm244, %v245, %v236
    %v247 = vsel %vm240, %v243, %v246
    %v248 = vsel %vm237, nan, %v247
    %v250 = vrot.slane %v144, 3
    %v253 = vrot.slane %v248, 2
    %vm255 = vcmask 1040384
    %v256 = vsel %vm255, %v250, %v253
    %v257 = vlaneseq
    %v258 = vshrl.u32 %v257, 7
    %v259 = vsub.s32 2, %v258
    %v260 = vrot.slane %v144, %v259
    %v261 = vmul.f32 %v260, %v256
    %v262 = vlaneseq
    %v263 = vshrl.u32 %v262, 7
    %v264 = vsub.s32 2, %v263
    %v265 = vrot.slane %v248, %v264
    %v266 = vmul.f32 %v265, %v256
    %v268 = vrot.slane %v266, 6
    %vm270 = vcmask 1041408
    %v271 = vsel %vm270, %v261, %v268
    %v272 = vlaneseq
    %v273 = vshrl.u32 %v272, 7
    %v274 = vsub.s32 1, %v273
    %v275 = vrot.slane %v144, %v274
    %v276 = vmul.f32 %v275, %v271
    %v277 = vlaneseq
    %v278 = vshrl.u32 %v277, 7
    %v279 = vsub.s32 1, %v278
    %v280 = vrot.slane %v248, %v279
    %v281 = vmul.f32 %v280, %v271
    %v283 = vrot.slane %v281, 4
    %vm285 = vcmask 1043456
    %v286 = vsel %vm285, %v276, %v283
    %v287 = vlaneseq
    %v288 = vshrl.u32 %v287, 7
    %v289 = vsub.s32 0, %v288
    %v290 = vrot.slane %v144, %v289
    %v291 = vmul.f32 %v290, %v286
    %v292 = vlaneseq
    %v293 = vshrl.u32 %v292, 7
    %v294 = vsub.s32 0, %v293
    %v295 = vrot.slane %v248, %v294
    %v296 = vmul.f32 %v295, %v286
    %v297 = vld [vmem:[#allocation5] sm:$0xff]
    %v298 = vld [vmem:[#allocation5 + $0x8] sm:$0xff]
    %vm299 = vcmask 130048
    %v301 = vsel %vm299, %v297, 0
    %v304 = vsel %vm299, %v298, 0
    %306 = vmatprep.subr.mxu0 0.0
    %307 = vmatpush1.msra.mxu0 %v291
    %308 = vmatprep.subr.mxu0 0.0
    %309 = vmatpush1.msra.mxu0 %v296
    %310 = vmatprep.subr.mxu0 0.0
    %311 = vmatpush1.msra.mxu0 0.0
    %312 = vmatprep.subr.mxu0 0.0
    %313 = vmatpush1.msra.mxu0 0.0
    %314 = vmatprep.subr.mxu0 0.0
    %315 = vmatpush1.msra.mxu0 0.0
    %316 = vmatprep.subr.mxu0 0.0
    %317 = vmatpush1.msra.mxu0 0.0
    %318 = vmatprep.subr.mxu0 0.0
    %319 = vmatpush1.msra.mxu0 0.0
    %320 = vmatprep.subr.mxu0 0.0
    %321 = vmatpush1.msra.mxu0 0.0
    %322 = vmatprep.subr.mxu0 0.0
    %323 = vmatpush1.msra.mxu0 0.0
    %324 = vmatprep.subr.mxu0 0.0
    %325 = vmatpush1.msra.mxu0 0.0
    %326 = vmatprep.subr.mxu0 0.0
    %327 = vmatpush1.msra.mxu0 0.0
    %328 = vmatprep.subr.mxu0 0.0
    %329 = vmatpush1.msra.mxu0 0.0
    %330 = vmatprep.subr.mxu0 0.0
    %331 = vmatpush1.msra.mxu0 0.0
    %332 = vmatprep.subr.mxu0 0.0
    %333 = vmatpush1.msra.mxu0 0.0
    %334 = vmatprep.subr.mxu0 0.0
    %335 = vmatpush1.msra.mxu0 0.0
    %336 = vmatprep.subr.mxu0 0.0
    %337 = vmatpush1.msra.mxu0 0.0
    %338 = vmatprep.subr.mxu0 0.0
    %339 = vmatpush1.msra.mxu0 0.0
    %340 = vmatprep.subr.mxu0 0.0
    %341 = vmatpush1.msra.mxu0 0.0
    %342 = vmatprep.subr.mxu0 0.0
    %343 = vmatpush1.msra.mxu0 0.0
    %344 = vmatprep.subr.mxu0 0.0
    %345 = vmatpush1.msra.mxu0 0.0
    %346 = vmatprep.subr.mxu0 0.0
    %347 = vmatpush1.msra.mxu0 0.0
    %348 = vmatprep.subr.mxu0 0.0
    %349 = vmatpush1.msra.mxu0 0.0
    %350 = vmatprep.subr.mxu0 0.0
    %351 = vmatpush1.msra.mxu0 0.0
    %352 = vmatprep.subr.mxu0 0.0
    %353 = vmatpush1.msra.mxu0 0.0
    %354 = vmatprep.subr.mxu0 0.0
    %355 = vmatpush1.msra.mxu0 0.0
    %356 = vmatprep.subr.mxu0 0.0
    %357 = vmatpush1.msra.mxu0 0.0
    %358 = vmatprep.subr.mxu0 0.0
    %359 = vmatpush1.msra.mxu0 0.0
    %360 = vmatprep.subr.mxu0 0.0
    %361 = vmatpush1.msra.mxu0 0.0
    %362 = vmatprep.subr.mxu0 0.0
    %363 = vmatpush1.msra.mxu0 0.0
    %364 = vmatprep.subr.mxu0 0.0
    %365 = vmatpush1.msra.mxu0 0.0
    %366 = vmatprep.subr.mxu0 0.0
    %367 = vmatpush1.msra.mxu0 0.0
    %368 = vmatprep.subr.mxu0 0.0
    %369 = vmatpush1.msra.mxu0 0.0
    %370 = vmatprep.mubr.f32.mxu0 0.0
    %371 = vmatmul.mubr.f32.gmra.mrb[0].mxu0 %v301
    %v372 = vpop.f32.mrb[0].mxu0
    %v373 = vadd.f32 0.0, %v372
    %v374 = vpop.f32.mrb[0].mxu0
    %375 = vmatprep.mubr.f32.mxu0 0.0
    %376 = vmatmul.mubr.f32.gmra.mrb[0].mxu0 %v304
    %v377 = vpop.f32.mrb[0].mxu0
    %v378 = vadd.f32 0.0, %v377
    %v379 = vpop.f32.mrb[0].mxu0
    %380 = vdwg.mxu0
    %v381 = vmul.f32 %v373, %v373
    %v382 = vmul.f32 %v378, %v378
    %v383 = vlaneseq
    %v384 = vand.u32 %v383, 127
    %v385 = vshrl.u32 %v384, 3
    %v386 = vand.u32 %v385, 1
    %v387 = vcvt.s32.f32 %v386
    %v388 = vmul.f32 %v387, 2.0
    %v389 = vsub.f32 1.0, %v388
    %v390 = vshrl.u32 %v384, 2
    %v391 = vand.u32 %v390, 1
    %v392 = vcvt.s32.f32 %v391
    %v393 = vmul.f32 %v392, 2.0
    %v394 = vsub.f32 1.0, %v393
    %v395 = vshrl.u32 %v384, 1
    %v396 = vand.u32 %v395, 1
    %v397 = vcvt.s32.f32 %v396
    %v398 = vmul.f32 %v397, 2.0
    %v399 = vsub.f32 1.0, %v398
    %v400 = vand.u32 %v384, 1
    %v401 = vcvt.s32.f32 %v400
    %v402 = vmul.f32 %v401, 2.0
    %v403 = vsub.f32 1.0, %v402
    %v404 = vsel %vm255, %v389, %v394
    %v405 = vsel %vm270, %v404, %v399
    %vm406 = vcmask 1042432
    %v407 = vsel %vm406, %v405, %v403
    %v409 = vsel %vm299, %v407, 0
    %411 = vmatprep.subr.mxu0 0.0
    %412 = vmatpush1.msra.mxu0 %v381
    %413 = vmatprep.subr.mxu0 0.0
    %414 = vmatpush1.msra.mxu0 %v382
    %415 = vmatprep.subr.mxu0 0.0
    %416 = vmatpush1.msra.mxu0 0.0
    %417 = vmatprep.subr.mxu0 0.0
    %418 = vmatpush1.msra.mxu0 0.0
    %419 = vmatprep.subr.mxu0 0.0
    %420 = vmatpush1.msra.mxu0 0.0
    %421 = vmatprep.subr.mxu0 0.0
    %422 = vmatpush1.msra.mxu0 0.0
    %423 = vmatprep.subr.mxu0 0.0
    %424 = vmatpush1.msra.mxu0 0.0
    %425 = vmatprep.subr.mxu0 0.0
    %426 = vmatpush1.msra.mxu0 0.0
    %427 = vmatprep.subr.mxu0 0.0
    %428 = vmatpush1.msra.mxu0 0.0
    %429 = vmatprep.subr.mxu0 0.0
    %430 = vmatpush1.msra.mxu0 0.0
    %431 = vmatprep.subr.mxu0 0.0
    %432 = vmatpush1.msra.mxu0 0.0
    %433 = vmatprep.subr.mxu0 0.0
    %434 = vmatpush1.msra.mxu0 0.0
    %435 = vmatprep.subr.mxu0 0.0
    %436 = vmatpush1.msra.mxu0 0.0
    %437 = vmatprep.subr.mxu0 0.0
    %438 = vmatpush1.msra.mxu0 0.0
    %439 = vmatprep.subr.mxu0 0.0
    %440 = vmatpush1.msra.mxu0 0.0
    %441 = vmatprep.subr.mxu0 0.0
    %442 = vmatpush1.msra.mxu0 0.0
    %443 = vmatprep.subr.mxu0 0.0
    %444 = vmatpush1.msra.mxu0 0.0
    %445 = vmatprep.subr.mxu0 0.0
    %446 = vmatpush1.msra.mxu0 0.0
    %447 = vmatprep.subr.mxu0 0.0
    %448 = vmatpush1.msra.mxu0 0.0
    %449 = vmatprep.subr.mxu0 0.0
    %450 = vmatpush1.msra.mxu0 0.0
    %451 = vmatprep.subr.mxu0 0.0
    %452 = vmatpush1.msra.mxu0 0.0
    %453 = vmatprep.subr.mxu0 0.0
    %454 = vmatpush1.msra.mxu0 0.0
    %455 = vmatprep.subr.mxu0 0.0
    %456 = vmatpush1.msra.mxu0 0.0
    %457 = vmatprep.subr.mxu0 0.0
    %458 = vmatpush1.msra.mxu0 0.0
    %459 = vmatprep.subr.mxu0 0.0
    %460 = vmatpush1.msra.mxu0 0.0
    %461 = vmatprep.subr.mxu0 0.0
    %462 = vmatpush1.msra.mxu0 0.0
    %463 = vmatprep.subr.mxu0 0.0
    %464 = vmatpush1.msra.mxu0 0.0
    %465 = vmatprep.subr.mxu0 0.0
    %466 = vmatpush1.msra.mxu0 0.0
    %467 = vmatprep.subr.mxu0 0.0
    %468 = vmatpush1.msra.mxu0 0.0
    %469 = vmatprep.subr.mxu0 0.0
    %470 = vmatpush1.msra.mxu0 0.0
    %471 = vmatprep.subr.mxu0 0.0
    %472 = vmatpush1.msra.mxu0 0.0
    %473 = vmatprep.subr.mxu0 0.0
    %474 = vmatpush1.msra.mxu0 0.0
    %475 = vmatprep.mubr.f32.mxu0 0.0
    %476 = vmatmul.mubr.f32.gmra.mrb[0].mxu0 %v409
    %v477 = vpop.f32.mrb[0].mxu0
    %v478 = vadd.f32 0.0, %v477
    %v479 = vpop.f32.mrb[0].mxu0
    %480 = vdwg.mxu0
    %481 = vst [vmem:[#allocation7] sm:$0xf] %v478
    // Predicated region
    $region18: #{tpu_custom_call.1} parent=1 // pred_check
      _
    $region19: #{tpu_custom_call.1} parent=1 // pred_check_branch
      %483 = sbr.rel (0) target = $region21
    $region20: #{tpu_custom_call.1} parent=1 // pred_region
      %s485 = ssub.s32 64, 64
      %486 = vsyncadd [#allocation4], %s485
      %s488 = sshll.u32 [#allocation7], 4
      %s489 = int_to_ptr.vmem [resolvable:$true] %s488
      %491 = dma.vmem_to_hbm [thread:$0]  %s489, 64, %s2, [#allocation4]
    $region21: #{tpu_custom_call.1} parent=1 // pred_fallthru
      _
    // Predicated region
    $region22: #{tpu_custom_call.1} parent=1 // pred_check
      _
    $region23: #{tpu_custom_call.1} parent=1 // pred_check_branch
      %493 = sbr.rel (0) target = $region25
    $region24: #{tpu_custom_call.1} parent=1 // pred_region
      %494 = dma.done [#allocation4], 64
    $region25: #{tpu_custom_call.1} parent=1 // pred_fallthru
      _
    %495 = vsyncpa [#allocation3], 1
    %496 = vsyncpa [#allocation6], 1
    %497 = vsyncpa [#allocation4], 1

</llo_original>
